<compile_context>
chip_gen: v5e
topology: v5e:2x2
jax: 0.10.0
libtpu: 0.0.40
codegen_flags: <defaults>
</compile_context>

<pallas_src>
import math
import functools

import jax
import jax.numpy as jnp
from jax.experimental import pallas as pl
from jax.experimental.pallas import tpu as pltpu

NEG_SLOPE = 0.01  # LeakyReLU slope


def _leaky_relu(v):
    return jnp.where(v > 0, v, NEG_SLOPE * v)


def _round_up(a, m):
    return ((a + m - 1) // m) * m


def _chip_vmem_bytes():
    """Physical VMEM of the local chip; conservative fallback if the query fails."""
    try:
        return int(pltpu.get_tpu_info().vmem_capacity_bytes)
    except Exception:
        return 64 * 2**20  # v7x per-TC size: safe lower bound for all chips


def residual_block_kernel(x_ref, w1_ref, w2_ref, b_ref, o_ref):
    """One batch-tile of the residual block; everything lives in VMEM.

    x_ref : (TB, H) f32/bf16          w1_ref/w2_ref : (H, H) bf16 (pre-transposed)
    b_ref : (2, H)  f32 (row 0 = b1, row 1 = b2)       o_ref : (TB, H) x-dtype
    """
    # Cast x to the bf16 MXU operand immediately; don't hold the f32 copy live.
    x_bf = x_ref[...].astype(jnp.bfloat16)

    b1 = b_ref[0:1, :]  # (1, H) f32, broadcasts over rows
    b2 = b_ref[1:2, :]

    # Linear 1 (+ bias): bf16 x bf16 on the MXU, f32 accumulation.
    h = jnp.dot(x_bf, w1_ref[...], preferred_element_type=jnp.float32) + b1
    h = _leaky_relu(h)

    # Linear 2 (+ bias).
    y = jnp.dot(h.astype(jnp.bfloat16), w2_ref[...],
                preferred_element_type=jnp.float32) + b2

    # Residual add: re-read x from VMEM (cheap vld) instead of keeping it in vregs.
    y = y + x_ref[...].astype(jnp.float32)
    o_ref[...] = _leaky_relu(y).astype(o_ref.dtype)


def prepare_residual_block_params(w1, b1, w2, b2):
    """One-time (param-load-time) weight preprocessing.

    w1/w2 come in PyTorch layout [out, in]; returns:
      w1_t, w2_t : [in, out] bf16 (MXU-native, half the DMA bytes)
      b_cat      : (2, H) f32 (row 0 = b1, row 1 = b2) -> one small DMA per step
    """
    w1_t = jnp.asarray(w1).T.astype(jnp.bfloat16)
    w2_t = jnp.asarray(w2).T.astype(jnp.bfloat16)
    b_cat = jnp.stack([jnp.asarray(b1), jnp.asarray(b2)], axis=0).astype(jnp.float32)
    return w1_t, w2_t, b_cat


@functools.partial(jax.jit, static_argnames=("block_b", "x_buffers"))
def residual_block_apply(x, w1_t, w2_t, b_cat, *, block_b=512, x_buffers=2):
    """x: [B, H]; w1_t/w2_t: [H, H] bf16 (pre-transposed); b_cat: [2, H] f32."""
    B, H = x.shape
    assert w1_t.shape == (H, H) and w2_t.shape == (H, H) and b_cat.shape == (2, H)

    vmem_cap = _chip_vmem_bytes()
    Hl = _round_up(H, 128)  # lane-padded width as physically stored in VMEM

    # Resident (single-buffered) weights + bias.
    w_resident = 2 * Hl * Hl * 2 + 2 * Hl * 4
    if w_resident > int(vmem_cap * 0.5):
        # TODO(synk): feature-dim tiled fallback for weights that don't fit in VMEM
        # (needed first on v7x at H ~ 4096).
        raise NotImplementedError(
            "ResidualBlock Pallas kernel: weights do not fit resident in VMEM; "
            "feature-dim tiled path not implemented.")

    # --- batch tile: as large as the VMEM budget (and block_b cap) allows ---------
    budget = int(vmem_cap * 0.6) - w_resident
    per_row = Hl * 4 * (x_buffers + 2 + 4)  # x bufs + out double-buffer + f32 temps
    max_tile_vmem = max(8, (budget // max(per_row, 1)) // 8 * 8)
    tile = max(8, min(block_b, max_tile_vmem))
    tile = _round_up(tile, 8)
    Bp8 = _round_up(B, 8)
    if Bp8 <= tile:
        # Single maximal tile per pass: no forced multi-step split on single-TC chips.
        tile = Bp8
    Bp = _round_up(B, tile)
    grid = (Bp // tile,)

    # Don't multi-buffer more than there are grid steps.
    x_bufs = max(1, min(x_buffers, grid[0]))

    # Batch padding only (feature dim stays un-padded: full-dim blocks are legal).
    xp = x if Bp == B else jnp.pad(x, ((0, Bp - B), (0, 0)))

    # --- VMEM limit: actual footprint with headroom, clamped to physical VMEM ------
    needed = w_resident + tile * Hl * 4 * (x_bufs + 2 + 4)
    vmem_limit = max(32 * 2**20, int(needed * 1.5))
    vmem_limit = int(min(vmem_limit, int(vmem_cap * 0.85)))

    out = pl.pallas_call(
        residual_block_kernel,
        out_shape=jax.ShapeDtypeStruct((Bp, H), x.dtype),
        grid_spec=pltpu.PrefetchScalarGridSpec(
            num_scalar_prefetch=0,
            grid=grid,
            in_specs=[
                # batch tile of x (pipeline depth sweepable via x_buffers)
                pl.BlockSpec((tile, H), lambda i: (i, 0),
                             pipeline_mode=pl.Buffered(x_bufs)),
                # grid-invariant weights/bias: single-buffered (no wasted 2nd buffer)
                pl.BlockSpec((H, H), lambda i: (0, 0),
                             pipeline_mode=pl.Buffered(1)),
                pl.BlockSpec((H, H), lambda i: (0, 0),
                             pipeline_mode=pl.Buffered(1)),
                pl.BlockSpec((2, H), lambda i: (0, 0),
                             pipeline_mode=pl.Buffered(1)),
            ],
            out_specs=pl.BlockSpec((tile, H), lambda i: (i, 0)),
        ),
        compiler_params=pltpu.CompilerParams(
            dimension_semantics=("parallel",),
            vmem_limit_bytes=vmem_limit,
        ),
    )(xp, w1_t, w2_t, b_cat)

    return out if Bp == B else out[:B]


def residual_block(x, w1, b1, w2, b2, *, block_b=512):
    """Convenience wrapper (prefer prepare_... once + residual_block_apply per call)."""
    w1_t, w2_t, b_cat = prepare_residual_block_params(w1, b1, w2, b2)
    return residual_block_apply(x, w1_t, w2_t, b_cat, block_b=block_b)


def _init_linear_params(key, hidden_dim):
    """Deterministic init mimicking torch.nn.Linear defaults (kaiming-uniform)."""
    k_w, k_b = jax.random.split(key)
    bound = 1.0 / math.sqrt(hidden_dim)
    w = jax.random.uniform(k_w, (hidden_dim, hidden_dim),
                           minval=-bound, maxval=bound, dtype=jnp.float32)
    b = jax.random.uniform(k_b, (hidden_dim,),
                           minval=-bound, maxval=bound, dtype=jnp.float32)
    return w, b


def _reference_f32(x, w1, b1, w2, b2):
    """Pure-JAX f32 reference matching the PyTorch forward."""
    out = x @ w1.T + b1
    out = _leaky_relu(out)
    out = out @ w2.T + b2
    out = out + x
    return _leaky_relu(out)


def _reference_bf16(x, w1, b1, w2, b2):
    """Reference mirroring the kernel's bf16-operand / f32-accumulate numerics."""
    h = jnp.dot(x.astype(jnp.bfloat16), w1.T.astype(jnp.bfloat16),
                preferred_element_type=jnp.float32) + b1
    h = _leaky_relu(h)
    y = jnp.dot(h.astype(jnp.bfloat16), w2.T.astype(jnp.bfloat16),
                preferred_element_type=jnp.float32) + b2
    return _leaky_relu(y + x)


if __name__ == "__main__":
    B, H = 16, 32  # small shapes: batch=16, hidden=32 (layer_in == layer_out == H)
    key = jax.random.PRNGKey(0)
    k_x, k_l1, k_l2 = jax.random.split(key, 3)

    x = jax.random.normal(k_x, (B, H), dtype=jnp.float32)
    w1, b1 = _init_linear_params(k_l1, H)
    w2, b2 = _init_linear_params(k_l2, H)

    # Preprocess weights ONCE (param-load time), then apply per call.
    w1_t, w2_t, b_cat = prepare_residual_block_params(w1, b1, w2, b2)
    out = residual_block_apply(x, w1_t, w2_t, b_cat)
    out = jax.block_until_ready(out)
    assert out.shape == (B, H)

    # Tight check vs a reference that mirrors the kernel's bf16/f32 numerics.
    ref_bf16 = _reference_bf16(x, w1, b1, w2, b2)
    assert jnp.allclose(out, ref_bf16, atol=1e-3, rtol=1e-3), "mismatch vs bf16 reference"

    # Loose check vs the pure f32 PyTorch-equivalent forward (bf16 MXU operands;
    # tolerance valid only at small H since bf16 rounding error grows with K).
    ref_f32 = _reference_f32(x, w1, b1, w2, b2)
    assert jnp.allclose(out, ref_f32, atol=5e-2, rtol=5e-2), "mismatch vs f32 reference"

    print("KERNEL_OK")
</pallas_src>

<mosaic_0001>
module attributes {stable_mosaic.version = 11 : i64} {
  func.func @residual_block_kernel(%arg0: i32, %arg1: memref<16x32xf32, #tpu.memory_space<vmem>>, %arg2: memref<32x32xbf16, #tpu.memory_space<vmem>>, %arg3: memref<32x32xbf16, #tpu.memory_space<vmem>>, %arg4: memref<2x32xf32, #tpu.memory_space<vmem>>, %arg5: memref<16x32xf32, #tpu.memory_space<vmem>>) attributes {dimension_semantics = [#tpu.dimension_semantics<parallel>], iteration_bounds = array<i64: 1>, scalar_prefetch = 0 : i64, scratch_operands = 0 : i64, tpu.core_type = #tpu.core_type<tc>, window_params = [{pipeline_mode = #tpu.pipeline_mode<synchronous>, transform_indices = @transform_0, window_bounds = array<i64: 16, 32>}, {pipeline_mode = #tpu.pipeline_mode<synchronous>, transform_indices = @transform_1, window_bounds = array<i64: 32, 32>}, {pipeline_mode = #tpu.pipeline_mode<synchronous>, transform_indices = @transform_2, window_bounds = array<i64: 32, 32>}, {pipeline_mode = #tpu.pipeline_mode<synchronous>, transform_indices = @transform_3, window_bounds = array<i64: 2, 32>}, {transform_indices = @transform_4, window_bounds = array<i64: 16, 32>}]} {
    %c0 = arith.constant 0 : index
    %c0_0 = arith.constant 0 : index
    %0 = vector.load %arg1[%c0, %c0_0] : memref<16x32xf32, #tpu.memory_space<vmem>>, vector<16x32xf32>
    %1 = arith.truncf %0 : vector<16x32xf32> to vector<16x32xbf16>
    %c0_1 = arith.constant 0 : index
    %c0_2 = arith.constant 0 : index
    %2 = vector.load %arg4[%c0_1, %c0_2] : memref<2x32xf32, #tpu.memory_space<vmem>>, vector<1x32xf32>
    %c1 = arith.constant 1 : index
    %c0_3 = arith.constant 0 : index
    %3 = vector.load %arg4[%c1, %c0_3] : memref<2x32xf32, #tpu.memory_space<vmem>>, vector<1x32xf32>
    %c0_4 = arith.constant 0 : index
    %c0_5 = arith.constant 0 : index
    %4 = vector.load %arg2[%c0_4, %c0_5] : memref<32x32xbf16, #tpu.memory_space<vmem>>, vector<32x32xbf16>
    %cst = arith.constant dense<0.000000e+00> : vector<16x32xf32>
    %5 = tpu.matmul %1, %4, %cst {dimension_numbers = #tpu.dot_dimension_numbers<[1], [0], [0], [1], [0, 0, 1, 1], [], []>} : vector<16x32xbf16>, vector<32x32xbf16>, vector<16x32xf32> -> vector<16x32xf32>
    %6 = vector.broadcast %2 : vector<1x32xf32> to vector<16x32xf32>
    %7 = arith.addf %5, %6 : vector<16x32xf32>
    %cst_6 = arith.constant 0.000000e+00 : f32
    %8 = vector.broadcast %cst_6 : f32 to vector<16x32xf32>
    %9 = arith.cmpf ogt, %7, %8 : vector<16x32xf32>
    %cst_7 = arith.constant 0.00999999977 : f32
    %10 = vector.broadcast %cst_7 : f32 to vector<16x32xf32>
    %11 = arith.mulf %10, %7 : vector<16x32xf32>
    %12 = arith.select %9, %7, %11 : vector<16x32xi1>, vector<16x32xf32>
    %13 = arith.truncf %12 : vector<16x32xf32> to vector<16x32xbf16>
    %c0_8 = arith.constant 0 : index
    %c0_9 = arith.constant 0 : index
    %14 = vector.load %arg3[%c0_8, %c0_9] : memref<32x32xbf16, #tpu.memory_space<vmem>>, vector<32x32xbf16>
    %cst_10 = arith.constant dense<0.000000e+00> : vector<16x32xf32>
    %15 = tpu.matmul %13, %14, %cst_10 {dimension_numbers = #tpu.dot_dimension_numbers<[1], [0], [0], [1], [0, 0, 1, 1], [], []>} : vector<16x32xbf16>, vector<32x32xbf16>, vector<16x32xf32> -> vector<16x32xf32>
    %16 = vector.broadcast %3 : vector<1x32xf32> to vector<16x32xf32>
    %17 = arith.addf %15, %16 : vector<16x32xf32>
    %c0_11 = arith.constant 0 : index
    %c0_12 = arith.constant 0 : index
    %18 = vector.load %arg1[%c0_11, %c0_12] : memref<16x32xf32, #tpu.memory_space<vmem>>, vector<16x32xf32>
    %19 = arith.addf %17, %18 : vector<16x32xf32>
    %cst_13 = arith.constant 0.000000e+00 : f32
    %20 = vector.broadcast %cst_13 : f32 to vector<16x32xf32>
    %21 = arith.cmpf ogt, %19, %20 : vector<16x32xf32>
    %cst_14 = arith.constant 0.00999999977 : f32
    %22 = vector.broadcast %cst_14 : f32 to vector<16x32xf32>
    %23 = arith.mulf %22, %19 : vector<16x32xf32>
    %24 = arith.select %21, %19, %23 : vector<16x32xi1>, vector<16x32xf32>
    %c0_15 = arith.constant 0 : index
    %c0_16 = arith.constant 0 : index
    %25 = vector.load %arg5[%c0_15, %c0_16] : memref<16x32xf32, #tpu.memory_space<vmem>>, vector<16x32xf32>
    tpu.vector_store %arg5[%c0_15, %c0_16], %24 {strides = array<i32>} : memref<16x32xf32, #tpu.memory_space<vmem>>, vector<16x32xf32>,
    return
  }
  func.func @transform_0(%arg0: i32) -> (i32, i32) {
    %c0_i32 = arith.constant 0 : i32
    %c0_i32_0 = arith.constant 0 : i32
    return %arg0, %c0_i32 : i32, i32
  }
  func.func @transform_1(%arg0: i32) -> (i32, i32) {
    %c0_i32 = arith.constant 0 : i32
    %c0_i32_0 = arith.constant 0 : i32
    %c0_i32_1 = arith.constant 0 : i32
    return %c0_i32, %c0_i32_0 : i32, i32
  }
  func.func @transform_2(%arg0: i32) -> (i32, i32) {
    %c0_i32 = arith.constant 0 : i32
    %c0_i32_0 = arith.constant 0 : i32
    %c0_i32_1 = arith.constant 0 : i32
    return %c0_i32, %c0_i32_0 : i32, i32
  }
  func.func @transform_3(%arg0: i32) -> (i32, i32) {
    %c0_i32 = arith.constant 0 : i32
    %c0_i32_0 = arith.constant 0 : i32
    %c0_i32_1 = arith.constant 0 : i32
    return %c0_i32, %c0_i32_0 : i32, i32
  }
  func.func @transform_4(%arg0: i32) -> (i32, i32) {
    %c0_i32 = arith.constant 0 : i32
    %c0_i32_0 = arith.constant 0 : i32
    return %arg0, %c0_i32 : i32, i32
  }
}

</mosaic_0001>

<llo_original>
// kernel: residual_block_apply.1
$region0: #{residual_block_apply.1}
  #allocation0 [shape = 'u32[]', space=smem, size = 0x4, offset = 0x4, fixed_abs, tag = 'smem constant byte address 0x4 - core index']
  #allocation1 [shape = 'u32[72,128]{1,0:T(1,128)}', space=vmem, size = 0x9000, scoped, tag = 'internal scratch']
  %s0 = inlined_call_operand.hbm [shape: f32[16,32], index: 0, kind: input, shape index: {}]
  %s1 = inlined_call_operand.hbm [shape: bf16[32,32], index: 1, kind: input, shape index: {}]
  %s2 = inlined_call_operand.hbm [shape: bf16[32,32], index: 2, kind: input, shape index: {}]
  %s3 = inlined_call_operand.vmem [shape: f32[2,32], index: 3, kind: input, shape index: {}]
  %s4 = inlined_call_operand.hbm [shape: f32[16,32], index: 4, kind: output, shape index: {}]
  %s5 = sld [smem:[#allocation0]]
  $region38: #{residual_block_apply.1} parent=0
    _
  %s7 = ssub.s32 1, %s5
  %s8 = scalar_select 0, %s7, %s5
  $region1: #{residual_block_apply.1} parent=0
    #allocation2 [shape = 'u8[8192]{0}', space=vmem, size = 0x2000, scoped, tag = 'input window, operand 0, single buffered']
    #allocation3 [shape = 's32[1]{0}', space=sflag, size = 0x4, scoped, tag = 'scoped memory for residual_block_apply.1']
    #allocation4 [shape = 's32[1]{0}', space=sflag, size = 0x4, scoped, tag = 'scoped memory for residual_block_apply.1']
    #allocation5 [shape = 'u8[8192]{0}', space=vmem, size = 0x2000, scoped, tag = 'input window, operand 1, single buffered']
    #allocation6 [shape = 's32[1]{0}', space=sflag, size = 0x4, scoped, tag = 'scoped memory for residual_block_apply.1']
    #allocation7 [shape = 'u8[8192]{0}', space=vmem, size = 0x2000, scoped, tag = 'input window, operand 2, single buffered']
    #allocation8 [shape = 'u8[8192]{0}', space=vmem, size = 0x2000, scoped, tag = 'output window, operand 0, single buffered']
    %9 = vsyncpa [#allocation3], 0
    %10 = vsyncpa [#allocation6], 0
    %11 = vsyncpa [#allocation4], 0
    // Predicated region
    $region2: #{residual_block_apply.1} parent=1 // pred_check
      _
    $region3: #{residual_block_apply.1} parent=1 // pred_check_branch
      %13 = sbr.rel (0) target = $region5
    $region4: #{residual_block_apply.1} parent=1 // pred_region
      %15 = vsyncadd [#allocation3], 0
      %s16 = sshll.u32 %s0, 4
      %s17 = int_to_ptr.hbm [resolvable:$true] %s16
      %s18 = sshll.u32 [#allocation2], 4
      %s19 = int_to_ptr.vmem [resolvable:$true] %s18
      %24 = dma.hbm_to_vmem [thread:$0]  %s17, 256, %s19, [#allocation3], 128, 128, 8
    $region5: #{residual_block_apply.1} parent=1 // pred_fallthru
      _
    // Predicated region
    $region6: #{residual_block_apply.1} parent=1 // pred_check
      _
    $region7: #{residual_block_apply.1} parent=1 // pred_check_branch
      %26 = sbr.rel (0) target = $region9
    $region8: #{residual_block_apply.1} parent=1 // pred_region
      %28 = vsyncadd [#allocation6], 0
      %s29 = sshll.u32 %s1, 4
      %s30 = int_to_ptr.hbm [resolvable:$true] %s29
      %s31 = sshll.u32 [#allocation5], 4
      %s32 = int_to_ptr.vmem [resolvable:$true] %s31
      %37 = dma.hbm_to_vmem [thread:$0]  %s30, 256, %s32, [#allocation6], 64, 64, 4
    $region9: #{residual_block_apply.1} parent=1 // pred_fallthru
      _
    // Predicated region
    $region10: #{residual_block_apply.1} parent=1 // pred_check
      _
    $region11: #{residual_block_apply.1} parent=1 // pred_check_branch
      %39 = sbr.rel (0) target = $region13
    $region12: #{residual_block_apply.1} parent=1 // pred_region
      %41 = vsyncadd [#allocation6], 0
      %s42 = sshll.u32 %s2, 4
      %s43 = int_to_ptr.hbm [resolvable:$true] %s42
      %s44 = sshll.u32 [#allocation7], 4
      %s45 = int_to_ptr.vmem [resolvable:$true] %s44
      %50 = dma.hbm_to_vmem [thread:$0]  %s43, 256, %s45, [#allocation6], 64, 64, 4
    $region13: #{residual_block_apply.1} parent=1 // pred_fallthru
      _
    // Predicated region
    $region14: #{residual_block_apply.1} parent=1 // pred_check
      _
    $region15: #{residual_block_apply.1} parent=1 // pred_check_branch
      %52 = sbr.rel (0) target = $region17
    $region16: #{residual_block_apply.1} parent=1 // pred_region
      _
    $region17: #{residual_block_apply.1} parent=1 // pred_fallthru
      _
    // Predicated region
    $region18: #{residual_block_apply.1} parent=1 // pred_check
      _
    $region19: #{residual_block_apply.1} parent=1 // pred_check_branch
      %54 = sbr.rel (0) target = $region21
    $region20: #{residual_block_apply.1} parent=1 // pred_region
      %56 = dma.done [#allocation3], 256
    $region21: #{residual_block_apply.1} parent=1 // pred_fallthru
      _
    // Predicated region
    $region22: #{residual_block_apply.1} parent=1 // pred_check
      _
    $region23: #{residual_block_apply.1} parent=1 // pred_check_branch
      %58 = sbr.rel (0) target = $region25
    $region24: #{residual_block_apply.1} parent=1 // pred_region
      %60 = dma.done [#allocation6], 256
    $region25: #{residual_block_apply.1} parent=1 // pred_fallthru
      _
    // Predicated region
    $region26: #{residual_block_apply.1} parent=1 // pred_check
      _
    $region27: #{residual_block_apply.1} parent=1 // pred_check_branch
      %62 = sbr.rel (0) target = $region29
    $region28: #{residual_block_apply.1} parent=1 // pred_region
      %64 = dma.done [#allocation6], 256
    $region29: #{residual_block_apply.1} parent=1 // pred_fallthru
      _
    %v66 = vld [vmem:[#allocation2] sm:$0xff]
    %v67 = vld [vmem:[#allocation2 + $0x8] sm:$0xff]
    %v68 = vpack.c.bf16 %v67, %v66
    %v69 = vld [vmem:[%s3] sm:$0x1]
    %v70 = vld [vmem:[%s3 + $0x1] sm:$0x1]
    %v71 = vld [vmem:[#allocation5] sm:$0xf]
    %v72 = vld [vmem:[#allocation5 + $0x4] sm:$0xf]
    %v73 = vld [vmem:[#allocation5 + $0x8] sm:$0xf]
    %v74 = vld [vmem:[#allocation5 + $0xc] sm:$0xf]
    %v75 = vperm.slane %v69, 0
    %v80 = vunpack.c.l.b16 %v71
    %v81 = vunpack.c.l.b16 %v72
    %v82 = vunpack.c.l.b16 %v73
    %v83 = vunpack.c.l.b16 %v74
    %v84 = vpack.c.b16 %v81, %v80
    %v85 = vpack.c.b16 %v83, %v82
    %vm88 = vcmask 261120
    %v90 = vsel %vm88, %v68, 0
    %92 = vmatpush.bf16.msra.mxu0 0
    %93 = vmatpush.bf16.msra.mxu0 0
    %94 = vmatpush.bf16.msra.mxu0 0
    %95 = vmatpush.bf16.msra.mxu0 0
    %96 = vmatpush.bf16.msra.mxu0 0
    %97 = vmatpush.bf16.msra.mxu0 0
    %98 = vmatpush.bf16.msra.mxu0 %v85
    %99 = vmatpush.bf16.msra.mxu0 %v84
    %100 = vmatmul.bf16.gmra.mxu0 %v90
    %v101 = vpop.f32.mrf.mxu0
    %v102 = vadd.f32 %v75, %v101
    %v103 = vpop.f32.mrf.mxu0
    %v104 = vadd.f32 %v75, %v103
    %105 = vdwg.mxu0
    %vm106 = vcmp.gt.f32.partialorder %v102, 0.0
    %vm107 = vcmp.gt.f32.partialorder %v104, 0.0
    %v108 = vmul.f32 %v102, 0.01
    %v109 = vmul.f32 %v104, 0.01
    %v110 = vsel %vm106, %v102, %v108
    %v111 = vsel %vm107, %v104, %v109
    %v112 = vpack.c.bf16 %v111, %v110
    %v113 = vld [vmem:[#allocation7] sm:$0xf]
    %v114 = vld [vmem:[#allocation7 + $0x4] sm:$0xf]
    %v115 = vld [vmem:[#allocation7 + $0x8] sm:$0xf]
    %v116 = vld [vmem:[#allocation7 + $0xc] sm:$0xf]
    %v117 = vperm.slane %v70, 0
    %v122 = vunpack.c.l.b16 %v113
    %v123 = vunpack.c.l.b16 %v114
    %v124 = vunpack.c.l.b16 %v115
    %v125 = vunpack.c.l.b16 %v116
    %v126 = vpack.c.b16 %v123, %v122
    %v127 = vpack.c.b16 %v125, %v124
    %v131 = vsel %vm88, %v112, 0
    %133 = vmatpush.bf16.msra.mxu0 0
    %134 = vmatpush.bf16.msra.mxu0 0
    %135 = vmatpush.bf16.msra.mxu0 0
    %136 = vmatpush.bf16.msra.mxu0 0
    %137 = vmatpush.bf16.msra.mxu0 0
    %138 = vmatpush.bf16.msra.mxu0 0
    %139 = vmatpush.bf16.msra.mxu0 %v127
    %140 = vmatpush.bf16.msra.mxu0 %v126
    %141 = vmatmul.bf16.gmra.mxu0 %v131
    %v142 = vpop.f32.mrf.mxu0
    %v143 = vadd.f32 %v117, %v142
    %v144 = vpop.f32.mrf.mxu0
    %v145 = vadd.f32 %v117, %v144
    %146 = vdwg.mxu0
    %v147 = vadd.f32 %v143, %v66
    %v148 = vadd.f32 %v145, %v67
    %vm149 = vcmp.gt.f32.partialorder %v147, 0.0
    %vm150 = vcmp.gt.f32.partialorder %v148, 0.0
    %v151 = vmul.f32 %v147, 0.01
    %v152 = vmul.f32 %v148, 0.01
    %v153 = vsel %vm149, %v147, %v151
    %v154 = vsel %vm150, %v148, %v152
    %155 = vst.msk [vmem:[#allocation8] sm:$0xff] %vm88, %v153
    %156 = vst.msk [vmem:[#allocation8 + $0x8] sm:$0xff] %vm88, %v154
    // Predicated region
    $region30: #{residual_block_apply.1} parent=1 // pred_check
      _
    $region31: #{residual_block_apply.1} parent=1 // pred_check_branch
      %158 = sbr.rel (0) target = $region33
    $region32: #{residual_block_apply.1} parent=1 // pred_region
      %160 = vsyncadd [#allocation4], 0
      %s161 = sshll.u32 [#allocation8], 4
      %s162 = int_to_ptr.vmem [resolvable:$true] %s161
      %s163 = sshll.u32 %s4, 4
      %s164 = int_to_ptr.hbm [resolvable:$true] %s163
      %169 = dma.vmem_to_hbm [thread:$0]  %s162, 256, %s164, [#allocation4], 128, 128, 8
    $region33: #{residual_block_apply.1} parent=1 // pred_fallthru
      _
    // Predicated region
    $region34: #{residual_block_apply.1} parent=1 // pred_check
      _
    $region35: #{residual_block_apply.1} parent=1 // pred_check_branch
      %171 = sbr.rel (0) target = $region37
    $region36: #{residual_block_apply.1} parent=1 // pred_region
      %173 = dma.done [#allocation4], 256
    $region37: #{residual_block_apply.1} parent=1 // pred_fallthru
      _
    %174 = vsyncpa [#allocation3], 1
    %175 = vsyncpa [#allocation6], 1
    %176 = vsyncpa [#allocation4], 1

</llo_original>
